<compile_context>
chip_gen: v7x
topology: tpu7x:2x2x1
jax: 0.10.0
libtpu: 0.0.40
codegen_flags: <defaults>
</compile_context>

<pallas_src>
import jax
import jax.numpy as jnp
from jax.experimental import pallas as pl
from jax.experimental.pallas import tpu as pltpu


def _round_up(x, m):
    return (x + m - 1) // m * m


# Conservative budget for the double-buffered, streamed x / out tiles. Leaves
# headroom for the (single-buffered) weight block, bias and compiler scratch
# under the 48 MiB scoped limit requested below, and under v7x's 64 MiB VMEM.
_TILE_VMEM_BUDGET = 24 * 1024 * 1024


def _pick_tile_n(n, in_p, out_l, in_bytes, out_bytes, requested):
    """Row-tile size: big enough to amortize per-grid-step overhead (v5e/v6e),
    small enough to (a) leave >=2 grid steps so dimension_semantics=("parallel",)
    can split rows across v7x's two TensorCores and (b) fit the VMEM budget."""
    cap = _round_up(pl.cdiv(n, 2), 8) if n > 8 else 8      # megacore-friendly
    tile = max(8, min(_round_up(requested, 8), cap))
    per_row = 2 * (in_p * in_bytes + out_l * out_bytes)     # 2 pipeline buffers each
    while tile > 8 and tile * per_row > _TILE_VMEM_BUDGET:
        tile = max(8, _round_up(tile // 2, 8))
    return tile


def _make_kernel(activation):
    def kernel(x_ref, w_ref, b_ref, o_ref):
        # Canonical (M, K) x (K, N) matmul on the MXU, f32 accumulation.
        h = jnp.dot(x_ref[...], w_ref[...], preferred_element_type=jnp.float32)
        h = h + b_ref[...]                       # (tile_n, out) + (1, out)
        if activation is not None:
            h = activation(h)
        o_ref[...] = h.astype(o_ref.dtype)
    return kernel


def _build_call(kernel, n, tile_n, in_p, out_feats, out_dtype, cost,
                single_buffer_params):
    const_kwargs = {}
    if single_buffer_params:
        # Weight / bias never change across grid steps: one VMEM buffer is
        # enough; frees VMEM for larger row tiles (matters most on v7x).
        const_kwargs = dict(pipeline_mode=pl.Buffered(1))
    return pl.pallas_call(
        kernel,
        out_shape=jax.ShapeDtypeStruct((n, out_feats), out_dtype),
        grid_spec=pltpu.PrefetchScalarGridSpec(
            num_scalar_prefetch=0,
            grid=(pl.cdiv(n, tile_n),),
            in_specs=[
                # x: streamed over rows -> double-buffered, pipelined DMA.
                pl.BlockSpec((tile_n, in_p), lambda i: (i, 0)),
                # weight / bias: constant block index -> fetched once, resident.
                pl.BlockSpec((in_p, out_feats), lambda i: (0, 0), **const_kwargs),
                pl.BlockSpec((1, out_feats), lambda i: (0, 0), **const_kwargs),
            ],
            out_specs=pl.BlockSpec((tile_n, out_feats), lambda i: (i, 0)),
        ),
        compiler_params=pltpu.CompilerParams(
            # Row tiles are independent: megacore-shardable on v7x.
            dimension_semantics=("parallel",),
            # Explicit headroom above default scoped limits; the tile picker
            # budgets well under this (and under v7x's 64 MiB physical VMEM).
            vmem_limit_bytes=48 * 1024 * 1024,
        ),
        cost_estimate=cost,
    )


def node_apply(x, weight, bias, *, activation=jax.nn.relu,
               compute_dtype=jnp.bfloat16, out_dtype=None, tile_n=1024):
    """Forward of NodeApplyModule: activation(x @ weight.T + bias).

    Args:
      x:      (N, in_feats)          node features
      weight: (out_feats, in_feats)  PyTorch nn.Linear layout
      bias:   (out_feats,)
      activation: elementwise callable (or None), e.g. jax.nn.relu
      compute_dtype: dtype for the x / W matmul streams (f32 accumulation)
      out_dtype: output dtype (defaults to x.dtype)
    Returns:
      (N, out_feats)
    """
    n, in_feats = x.shape
    out_feats, _ = weight.shape
    if out_dtype is None:
        out_dtype = x.dtype
    compute_dtype = jnp.dtype(compute_dtype if compute_dtype is not None else x.dtype)

    # Zero-pad only the contraction dim, only when needed (exact: padded
    # K-columns contribute zero). No node-dim padding, no output slicing.
    in_p = _round_up(in_feats, 128)

    x_c = x.astype(compute_dtype)
    w_c = weight.T.astype(compute_dtype)          # one cheap XLA transpose, (in, out)
    if in_p != in_feats:
        x_c = jnp.pad(x_c, ((0, 0), (0, in_p - in_feats)))
        w_c = jnp.pad(w_c, ((0, in_p - in_feats), (0, 0)))
    b_c = bias.astype(jnp.float32).reshape(1, out_feats)

    out_l = _round_up(out_feats, 128)             # lane-padded width (VMEM budget only)
    tile_n = _pick_tile_n(n, in_p, out_l,
                          jnp.dtype(compute_dtype).itemsize,
                          jnp.dtype(out_dtype).itemsize, tile_n)

    cost = pl.CostEstimate(
        flops=2 * n * in_p * out_feats,
        transcendentals=0,
        bytes_accessed=(x_c.size * x_c.dtype.itemsize
                        + w_c.size * w_c.dtype.itemsize
                        + b_c.size * 4
                        + n * out_feats * jnp.dtype(out_dtype).itemsize),
    )

    kernel = _make_kernel(activation)
    try:
        call = _build_call(kernel, n, tile_n, in_p, out_feats, out_dtype, cost,
                           single_buffer_params=True)
        return call(x_c, w_c, b_c)
    except Exception:
        # Fallback for jax versions where pipeline_mode=pl.Buffered(1) is not
        # accepted on a pallas_call BlockSpec: default double-buffered params.
        call = _build_call(kernel, n, tile_n, in_p, out_feats, out_dtype, cost,
                           single_buffer_params=False)
        return call(x_c, w_c, b_c)


if __name__ == "__main__":
    # Small shapes consistent with the module: N nodes, in_feats -> out_feats.
    N, IN_FEATS, OUT_FEATS = 64, 32, 16

    key = jax.random.PRNGKey(0)
    kx, kw, kb = jax.random.split(key, 3)

    x = jax.random.normal(kx, (N, IN_FEATS), dtype=jnp.float32)
    # nn.Linear parameter shapes: W = (out, in), b = (out,)
    weight = jax.random.normal(kw, (OUT_FEATS, IN_FEATS), dtype=jnp.float32) * 0.1
    bias = jax.random.normal(kb, (OUT_FEATS,), dtype=jnp.float32) * 0.1

    out = node_apply(x, weight, bias)
    jax.block_until_ready(out)
    assert out.shape == (N, OUT_FEATS)
    assert out.dtype == x.dtype

    # Reference checks: kernel streams x/W in bf16 with f32 accumulation, so
    # compare tightly against a bf16-input reference and loosely against f32.
    ref_bf16 = jnp.maximum(
        jnp.dot(x.astype(jnp.bfloat16), weight.T.astype(jnp.bfloat16),
                preferred_element_type=jnp.float32) + bias, 0.0)
    ref_f32 = jnp.maximum(x @ weight.T + bias, 0.0)
    assert jnp.allclose(out, ref_bf16, atol=1e-2, rtol=1e-2)
    assert jnp.allclose(out, ref_f32, atol=5e-2, rtol=5e-2)

    print("KERNEL_OK")
</pallas_src>

<mosaic_0001>
module attributes {stable_mosaic.version = 11 : i64} {
  func.func @kernel(%arg0: i32, %arg1: memref<32x128xbf16, #tpu.memory_space<vmem>>, %arg2: memref<128x16xbf16, #tpu.memory_space<vmem>>, %arg3: memref<1x16xf32, #tpu.memory_space<vmem>>, %arg4: memref<32x16xf32, #tpu.memory_space<vmem>>) attributes {dimension_semantics = [#tpu.dimension_semantics<parallel>], iteration_bounds = array<i64: 2>, scalar_prefetch = 0 : i64, scratch_operands = 0 : i64, tpu.core_type = #tpu.core_type<tc>, window_params = [{transform_indices = @transform_0, window_bounds = array<i64: 32, 128>}, {pipeline_mode = #tpu.pipeline_mode<synchronous>, transform_indices = @transform_1, window_bounds = array<i64: 128, 16>}, {pipeline_mode = #tpu.pipeline_mode<synchronous>, transform_indices = @transform_2, window_bounds = array<i64: 1, 16>}, {transform_indices = @transform_3, window_bounds = array<i64: 32, 16>}]} {
    %c0 = arith.constant 0 : index
    %c0_0 = arith.constant 0 : index
    %0 = vector.load %arg1[%c0, %c0_0] : memref<32x128xbf16, #tpu.memory_space<vmem>>, vector<32x128xbf16>
    %c0_1 = arith.constant 0 : index
    %c0_2 = arith.constant 0 : index
    %1 = vector.load %arg2[%c0_1, %c0_2] : memref<128x16xbf16, #tpu.memory_space<vmem>>, vector<128x16xbf16>
    %cst = arith.constant dense<0.000000e+00> : vector<32x16xf32>
    %2 = tpu.matmul %0, %1, %cst {dimension_numbers = #tpu.dot_dimension_numbers<[1], [0], [0], [1], [0, 0, 1, 1], [], []>} : vector<32x128xbf16>, vector<128x16xbf16>, vector<32x16xf32> -> vector<32x16xf32>
    %c0_3 = arith.constant 0 : index
    %c0_4 = arith.constant 0 : index
    %3 = vector.load %arg3[%c0_3, %c0_4] : memref<1x16xf32, #tpu.memory_space<vmem>>, vector<1x16xf32>
    %4 = vector.broadcast %3 : vector<1x16xf32> to vector<32x16xf32>
    %5 = arith.addf %2, %4 : vector<32x16xf32>
    %cst_5 = arith.constant 0.000000e+00 : f32
    %6 = vector.broadcast %cst_5 : f32 to vector<32x16xf32>
    %7 = arith.maximumf %5, %6 : vector<32x16xf32>
    %c0_6 = arith.constant 0 : index
    %c0_7 = arith.constant 0 : index
    %8 = vector.load %arg4[%c0_6, %c0_7] : memref<32x16xf32, #tpu.memory_space<vmem>>, vector<32x16xf32>
    tpu.vector_store %arg4[%c0_6, %c0_7], %7 {strides = array<i32>} : memref<32x16xf32, #tpu.memory_space<vmem>>, vector<32x16xf32>,
    return
  }
  func.func @transform_0(%arg0: i32) -> (i32, i32) {
    %c0_i32 = arith.constant 0 : i32
    %c0_i32_0 = arith.constant 0 : i32
    return %arg0, %c0_i32 : i32, i32
  }
  func.func @transform_1(%arg0: i32) -> (i32, i32) {
    %c0_i32 = arith.constant 0 : i32
    %c0_i32_0 = arith.constant 0 : i32
    %c0_i32_1 = arith.constant 0 : i32
    return %c0_i32, %c0_i32_0 : i32, i32
  }
  func.func @transform_2(%arg0: i32) -> (i32, i32) {
    %c0_i32 = arith.constant 0 : i32
    %c0_i32_0 = arith.constant 0 : i32
    %c0_i32_1 = arith.constant 0 : i32
    return %c0_i32, %c0_i32_0 : i32, i32
  }
  func.func @transform_3(%arg0: i32) -> (i32, i32) {
    %c0_i32 = arith.constant 0 : i32
    %c0_i32_0 = arith.constant 0 : i32
    return %arg0, %c0_i32 : i32, i32
  }
}

module attributes {stable_mosaic.version = 11 : i64} {
  func.func @kernel(%arg0: i32, %arg1: memref<32x128xbf16, #tpu.memory_space<vmem>>, %arg2: memref<128x16xbf16, #tpu.memory_space<vmem>>, %arg3: memref<1x16xf32, #tpu.memory_space<vmem>>, %arg4: memref<32x16xf32, #tpu.memory_space<vmem>>) attributes {dimension_semantics = [#tpu.dimension_semantics<parallel>], iteration_bounds = array<i64: 2>, scalar_prefetch = 0 : i64, scratch_operands = 0 : i64, tpu.core_type = #tpu.core_type<tc>, window_params = [{transform_indices = @transform_0, window_bounds = array<i64: 32, 128>}, {pipeline_mode = #tpu.pipeline_mode<synchronous>, transform_indices = @transform_1, window_bounds = array<i64: 128, 16>}, {pipeline_mode = #tpu.pipeline_mode<synchronous>, transform_indices = @transform_2, window_bounds = array<i64: 1, 16>}, {transform_indices = @transform_3, window_bounds = array<i64: 32, 16>}]} {
    %c0 = arith.constant 0 : index
    %c0_0 = arith.constant 0 : index
    %0 = vector.load %arg1[%c0, %c0_0] : memref<32x128xbf16, #tpu.memory_space<vmem>>, vector<32x128xbf16>
    %c0_1 = arith.constant 0 : index
    %c0_2 = arith.constant 0 : index
    %1 = vector.load %arg2[%c0_1, %c0_2] : memref<128x16xbf16, #tpu.memory_space<vmem>>, vector<128x16xbf16>
    %cst = arith.constant dense<0.000000e+00> : vector<32x16xf32>
    %2 = tpu.matmul %0, %1, %cst {dimension_numbers = #tpu.dot_dimension_numbers<[1], [0], [0], [1], [0, 0, 1, 1], [], []>} : vector<32x128xbf16>, vector<128x16xbf16>, vector<32x16xf32> -> vector<32x16xf32>
    %c0_3 = arith.constant 0 : index
    %c0_4 = arith.constant 0 : index
    %3 = vector.load %arg3[%c0_3, %c0_4] : memref<1x16xf32, #tpu.memory_space<vmem>>, vector<1x16xf32>
    %4 = vector.broadcast %3 : vector<1x16xf32> to vector<32x16xf32>
    %5 = arith.addf %2, %4 : vector<32x16xf32>
    %cst_5 = arith.constant 0.000000e+00 : f32
    %6 = vector.broadcast %cst_5 : f32 to vector<32x16xf32>
    %7 = arith.maximumf %5, %6 : vector<32x16xf32>
    %c0_6 = arith.constant 0 : index
    %c0_7 = arith.constant 0 : index
    %8 = vector.load %arg4[%c0_6, %c0_7] : memref<32x16xf32, #tpu.memory_space<vmem>>, vector<32x16xf32>
    tpu.vector_store %arg4[%c0_6, %c0_7], %7 {strides = array<i32>} : memref<32x16xf32, #tpu.memory_space<vmem>>, vector<32x16xf32>,
    return
  }
  func.func @transform_0(%arg0: i32) -> (i32, i32) {
    %c0_i32 = arith.constant 0 : i32
    %c0_i32_0 = arith.constant 0 : i32
    return %arg0, %c0_i32 : i32, i32
  }
  func.func @transform_1(%arg0: i32) -> (i32, i32) {
    %c0_i32 = arith.constant 0 : i32
    %c0_i32_0 = arith.constant 0 : i32
    %c0_i32_1 = arith.constant 0 : i32
    return %c0_i32, %c0_i32_0 : i32, i32
  }
  func.func @transform_2(%arg0: i32) -> (i32, i32) {
    %c0_i32 = arith.constant 0 : i32
    %c0_i32_0 = arith.constant 0 : i32
    %c0_i32_1 = arith.constant 0 : i32
    return %c0_i32, %c0_i32_0 : i32, i32
  }
  func.func @transform_3(%arg0: i32) -> (i32, i32) {
    %c0_i32 = arith.constant 0 : i32
    %c0_i32_0 = arith.constant 0 : i32
    return %arg0, %c0_i32 : i32, i32
  }
}

</mosaic_0001>

<llo_original>
// kernel: tpu_custom_call.1
$region0: #{tpu_custom_call.1}
  #allocation0 [shape = 'u32[]', space=smem, size = 0x4, offset = 0x4, fixed_abs, tag = 'smem constant byte address 0x4 - core index']
  #allocation1 [shape = 'u32[144,128]{1,0:T(1,128)}', space=vmem, size = 0x12000, scoped, tag = 'internal scratch']
  %s0 = inlined_call_operand.vmem [shape: bf16[64,128], index: 0, kind: input, shape index: {}]
  %s1 = inlined_call_operand.vmem [shape: bf16[128,16], index: 1, kind: input, shape index: {}]
  %s2 = inlined_call_operand.vmem [shape: f32[1,16], index: 2, kind: input, shape index: {}]
  %s3 = inlined_call_operand.vmem [shape: f32[64,16], index: 3, kind: output, shape index: {}]
  %s4 = sld [smem:[#allocation0]]
  $region45: #{tpu_custom_call.1} parent=0
    _
  %s6 = ssub.s32 1, %s4
  %s7 = scalar_select 0, %s6, %s4
  loop: start=0, step=1, limit=4
  $region2: #{tpu_custom_call.1} parent=0 // loop_pre_header
    _
  $region3: #{tpu_custom_call.1} parent=0 // loop_header
    %s9 = sphi 0, %s13
    %p10 = scmp.ge.s32.totalorder %s9, 4
    %s19 = sphi 0, %s21
    %s22 = sphi 0, %s19
    %s23 = sphi 0, %s22
    %s39 = sphi 0, %s23
    %s43 = sphi 0, %s43
    %s45 = sphi 0, %s43
    %s46 = sphi 0, %s45
    %s60 = sphi 0, %s46
    %s64 = sphi 0, %s64
    %s66 = sphi 0, %s64
    %s67 = sphi 0, %s66
    %s81 = sphi 0, %s67
    %s87 = sphi 0, %s89
    %s90 = sphi 0, %s87
    %s91 = sphi 0, %s90
    %s107 = sphi 0, %s91
  $region4: #{tpu_custom_call.1} parent=0 // loop_header_branch
    %12 = sbr.rel (%p10) target = $region8
  $region5: #{tpu_custom_call.1} parent=0 // loop_body
    %s14 = ssub.s32 %s9, 1
    %s15 = ssub.s32 %s9, 2
    %s16 = sadd.s32 %s9, 1
    %s17 = ssub.s32 %s9, %s16
    %p18 = scmp.eq.s32.totalorder %s17, 0
    %s20 = sadd.s32 %s19, 1
    %s21 = scalar_select %p18, %s19, %s20
    %p24 = pneg %p18
    %p25 = scmp.eq.s32.totalorder %s9, 1
    %p26 = por %p24, %p25
    %p27 = scmp.ne.s32.totalorder %s19, %s22
    %p28 = scmp.eq.s32.totalorder %s9, 0
    %p29 = por %p27, %p28
    %p30 = scmp.ne.s32.totalorder %s19, %s22
    %p31 = scmp.eq.s32.totalorder %s14, 1
    %p32 = por %p30, %p31
    %p33 = scmp.ne.s32.totalorder %s22, %s23
    %p34 = scmp.eq.s32.totalorder %s14, 0
    %p35 = por %p33, %p34
    %p36 = scmp.ne.s32.totalorder %s22, %s23
    %p37 = scmp.eq.s32.totalorder %s15, 1
    %p38 = por %p36, %p37
    %p40 = scmp.ne.s32.totalorder %s23, %s39
    %p41 = scmp.eq.s32.totalorder %s15, 0
    %p42 = por %p40, %p41
    %s44 = sadd.s32 %s43, 1
    %p47 = scmp.eq.s32.totalorder %s9, 1
    %p48 = scmp.ne.s32.totalorder %s43, %s45
    %p49 = scmp.eq.s32.totalorder %s9, 0
    %p50 = por %p48, %p49
    %p51 = scmp.ne.s32.totalorder %s43, %s45
    %p52 = scmp.eq.s32.totalorder %s14, 1
    %p53 = por %p51, %p52
    %p54 = scmp.ne.s32.totalorder %s45, %s46
    %p55 = scmp.eq.s32.totalorder %s14, 0
    %p56 = por %p54, %p55
    %p57 = scmp.ne.s32.totalorder %s45, %s46
    %p58 = scmp.eq.s32.totalorder %s15, 1
    %p59 = por %p57, %p58
    %p61 = scmp.ne.s32.totalorder %s46, %s60
    %p62 = scmp.eq.s32.totalorder %s15, 0
    %p63 = por %p61, %p62
    %s65 = sadd.s32 %s64, 1
    %p68 = scmp.eq.s32.totalorder %s9, 1
    %p69 = scmp.ne.s32.totalorder %s64, %s66
    %p70 = scmp.eq.s32.totalorder %s9, 0
    %p71 = por %p69, %p70
    %p72 = scmp.ne.s32.totalorder %s64, %s66
    %p73 = scmp.eq.s32.totalorder %s14, 1
    %p74 = por %p72, %p73
    %p75 = scmp.ne.s32.totalorder %s66, %s67
    %p76 = scmp.eq.s32.totalorder %s14, 0
    %p77 = por %p75, %p76
    %p78 = scmp.ne.s32.totalorder %s66, %s67
    %p79 = scmp.eq.s32.totalorder %s15, 1
    %p80 = por %p78, %p79
    %p82 = scmp.ne.s32.totalorder %s67, %s81
    %p83 = scmp.eq.s32.totalorder %s15, 0
    %p84 = por %p82, %p83
    %s85 = ssub.s32 %s9, %s16
    %p86 = scmp.eq.s32.totalorder %s85, 0
    %s88 = sadd.s32 %s87, 1
    %s89 = scalar_select %p86, %s87, %s88
    %p92 = pneg %p86
    %p93 = scmp.eq.s32.totalorder %s9, 1
    %p94 = por %p92, %p93
    %p95 = scmp.ne.s32.totalorder %s87, %s90
    %p96 = scmp.eq.s32.totalorder %s9, 0
    %p97 = por %p95, %p96
    %p98 = scmp.ne.s32.totalorder %s87, %s90
    %p99 = scmp.eq.s32.totalorder %s14, 1
    %p100 = por %p98, %p99
    %p101 = scmp.ne.s32.totalorder %s90, %s91
    %p102 = scmp.eq.s32.totalorder %s14, 0
    %p103 = por %p101, %p102
    %p104 = scmp.ne.s32.totalorder %s90, %s91
    %p105 = scmp.eq.s32.totalorder %s15, 1
    %p106 = por %p104, %p105
    %p108 = scmp.ne.s32.totalorder %s91, %s107
    %p109 = scmp.eq.s32.totalorder %s15, 0
    %p110 = por %p108, %p109
    %p111 = scmp.le.s32.totalorder 1, %s9
    %p112 = scmp.lt.s32.totalorder %s9, 3
    %p113 = pnand %p111, %p112
    %p114 = pneg %p113
    // Predicated region
    $region9: #{tpu_custom_call.1} parent=5 // pred_check
      _
    $region10: #{tpu_custom_call.1} parent=5 // pred_check_branch
      %116 = sbr.rel (%p113) target = $region12
    $region11: #{tpu_custom_call.1} parent=5 // pred_region
      %s117 = ssub.s32 %s9, 1
      // Predicated region
      $region13: #{tpu_custom_call.1} parent=11 // pred_check
        %p118 = pneg %p56
      $region14: #{tpu_custom_call.1} parent=11 // pred_check_branch
        %120 = sbr.rel (%p118) target = $region16
      $region15: #{tpu_custom_call.1} parent=11 // pred_region
        _
      $region16: #{tpu_custom_call.1} parent=11 // pred_fallthru
        _
      // Predicated region
      $region17: #{tpu_custom_call.1} parent=11 // pred_check
        %p121 = pneg %p77
      $region18: #{tpu_custom_call.1} parent=11 // pred_check_branch
        %123 = sbr.rel (%p121) target = $region20
      $region19: #{tpu_custom_call.1} parent=11 // pred_region
        _
      $region20: #{tpu_custom_call.1} parent=11 // pred_fallthru
        _
    $region12: #{tpu_custom_call.1} parent=5 // pred_fallthru
      _
    %p124 = scmp.lt.s32.totalorder %s9, 2
    // Predicated region
    $region21: #{tpu_custom_call.1} parent=5 // pred_check
      %p125 = pneg %p124
    $region22: #{tpu_custom_call.1} parent=5 // pred_check_branch
      %127 = sbr.rel (%p125) target = $region24
    $region23: #{tpu_custom_call.1} parent=5 // pred_region
      // Predicated region
      $region25: #{tpu_custom_call.1} parent=23 // pred_check
        %p128 = pneg %p29
      $region26: #{tpu_custom_call.1} parent=23 // pred_check_branch
        %130 = sbr.rel (%p128) target = $region28
      $region27: #{tpu_custom_call.1} parent=23 // pred_region
        %s131 = smul.u32 4, %s9
        %p132 = scmp.lt.s32.totalorder %s131, 7
        %s133 = scalar_select %p132, %s131, 7
        %s134 = smul.addr %s133, 4
        %s135 = scalar_lea.vmem %s0, %s134
        %s136 = smul.u32 4, %s9
      $region28: #{tpu_custom_call.1} parent=23 // pred_fallthru
        _
    $region24: #{tpu_custom_call.1} parent=5 // pred_fallthru
      _
    %p137 = scmp.le.s32.totalorder 1, %s9
    %p138 = scmp.lt.s32.totalorder %s9, 3
    %p139 = pnand %p137, %p138
    %p140 = pneg %p139
    // Predicated region
    $region29: #{tpu_custom_call.1} parent=5 // pred_check
      _
    $region30: #{tpu_custom_call.1} parent=5 // pred_check_branch
      %142 = sbr.rel (%p139) target = $region32
    $region31: #{tpu_custom_call.1} parent=5 // pred_region
      %s143 = ssub.s32 %s9, 1
      %s144 = smul.u32 4, %s14
      %p145 = scmp.lt.s32.totalorder %s144, 7
      %s146 = scalar_select %p145, %s144, 7
      %s147 = smul.addr %s146, 4
      %s148 = scalar_lea.vmem %s0, %s147
      %p149 = pneg %p35
      %p150 = pneg %p32
      %p151 = pneg %p56
      %p152 = pneg %p53
      %p153 = pneg %p77
      %p154 = pneg %p74
      %p155 = pneg %p103
      %p156 = pneg %p100
      %s157 = smul.u32 4, %s14
      %p158 = scmp.lt.s32.totalorder %s157, 7
      %s159 = scalar_select %p158, %s157, 7
      %s160 = smul.addr %s159, 8
      %s161 = scalar_lea.vmem %s3, %s160
      %s162 = smul.u32 4, %s14
      %p163 = scmp.lt.s32.totalorder %s162, 7
      %s164 = scalar_select %p163, %s162, 7
      %s165 = smul.addr %s164, 4
      %s166 = scalar_lea.vmem %s0, %s165
      %s167 = smul.u32 4, %s14
      %s168 = smul.u32 4, %s14
      %p169 = scmp.lt.s32.totalorder %s168, 7
      %s170 = scalar_select %p169, %s168, 7
      %s171 = smul.addr %s170, 8
      %s172 = scalar_lea.vmem %s3, %s171
      %s173 = smul.u32 4, %s14
      %v175 = vld [vmem:[%s166] sm:$0xf]
      %v176 = vld [vmem:[%s166 + $0x4] sm:$0xf]
      %v177 = vld [vmem:[%s166 + $0x8] sm:$0xf]
      %v178 = vld [vmem:[%s166 + $0xc] sm:$0xf]
      %v179 = vld [vmem:[%s1] sm:$0xf]
      %v180 = vld [vmem:[%s1 + $0x4] sm:$0xf]
      %v181 = vld [vmem:[%s1 + $0x8] sm:$0xf]
      %v182 = vld [vmem:[%s1 + $0xc] sm:$0xf]
      %v183 = vld [vmem:[%s1 + $0x10] sm:$0xf]
      %v184 = vld [vmem:[%s1 + $0x14] sm:$0xf]
      %v185 = vld [vmem:[%s1 + $0x18] sm:$0xf]
      %v186 = vld [vmem:[%s1 + $0x1c] sm:$0xf]
      %v187 = vld [vmem:[%s1 + $0x20] sm:$0xf]
      %v188 = vld [vmem:[%s1 + $0x24] sm:$0xf]
      %v189 = vld [vmem:[%s1 + $0x28] sm:$0xf]
      %v190 = vld [vmem:[%s1 + $0x2c] sm:$0xf]
      %v191 = vld [vmem:[%s1 + $0x30] sm:$0xf]
      %v192 = vld [vmem:[%s1 + $0x34] sm:$0xf]
      %v193 = vld [vmem:[%s1 + $0x38] sm:$0xf]
      %v194 = vld [vmem:[%s1 + $0x3c] sm:$0xf]
      %v195 = vld [vmem:[%s2] sm:$0x1]
      %v197 = vlaneseq
      %v198 = vshrl.u32 %v197, 7
      %v199 = vsub.s32 0, %v198
      %v200 = vrot.slane %v195, %v199
      %v206 = vunpack.c.l.b16 %v175
      %v207 = vunpack.c.l.b16 %v176
      %v208 = vunpack.c.l.b16 %v177
      %v209 = vunpack.c.l.b16 %v178
      %v210 = vpack.c.b16 %v207, %v206
      %v211 = vpack.c.b16 %v209, %v208
      %v230 = vunpack.c.l.b16 %v179
      %v231 = vunpack.c.l.b16 %v180
      %v232 = vunpack.c.l.b16 %v181
      %v233 = vunpack.c.l.b16 %v182
      %v234 = vunpack.c.l.b16 %v183
      %v235 = vunpack.c.l.b16 %v184
      %v236 = vunpack.c.l.b16 %v185
      %v237 = vunpack.c.l.b16 %v186
      %v238 = vunpack.c.l.b16 %v187
      %v239 = vunpack.c.l.b16 %v188
      %v240 = vunpack.c.l.b16 %v189
      %v241 = vunpack.c.l.b16 %v190
      %v242 = vunpack.c.l.b16 %v191
      %v243 = vunpack.c.l.b16 %v192
      %v244 = vunpack.c.l.b16 %v193
      %v245 = vunpack.c.l.b16 %v194
      %v246 = vpack.c.b16 %v231, %v230
      %v247 = vpack.c.b16 %v233, %v232
      %v248 = vpack.c.b16 %v235, %v234
      %v249 = vpack.c.b16 %v237, %v236
      %v250 = vpack.c.b16 %v239, %v238
      %v251 = vpack.c.b16 %v241, %v240
      %v252 = vpack.c.b16 %v243, %v242
      %v253 = vpack.c.b16 %v245, %v244
      %262 = vmatprep.subr.bf16.mxu0 0
      %263 = vmatpush1.bf16.msra.mxu0 %v246
      %264 = vmatprep.subr.bf16.mxu0 0
      %265 = vmatpush1.bf16.msra.mxu0 %v247
      %266 = vmatprep.subr.bf16.mxu0 0
      %267 = vmatpush1.bf16.msra.mxu0 %v248
      %268 = vmatprep.subr.bf16.mxu0 0
      %269 = vmatpush1.bf16.msra.mxu0 %v249
      %270 = vmatprep.subr.bf16.mxu0 0
      %271 = vmatpush1.bf16.msra.mxu0 %v250
      %272 = vmatprep.subr.bf16.mxu0 0
      %273 = vmatpush1.bf16.msra.mxu0 %v251
      %274 = vmatprep.subr.bf16.mxu0 0
      %275 = vmatpush1.bf16.msra.mxu0 %v252
      %276 = vmatprep.subr.bf16.mxu0 0
      %277 = vmatpush1.bf16.msra.mxu0 %v253
      %278 = vmatprep.subr.bf16.mxu0 0
      %279 = vmatpush1.bf16.msra.mxu0 0
      %280 = vmatprep.subr.bf16.mxu0 0
      %281 = vmatpush1.bf16.msra.mxu0 0
      %282 = vmatprep.subr.bf16.mxu0 0
      %283 = vmatpush1.bf16.msra.mxu0 0
      %284 = vmatprep.subr.bf16.mxu0 0
      %285 = vmatpush1.bf16.msra.mxu0 0
      %286 = vmatprep.subr.bf16.mxu0 0
      %287 = vmatpush1.bf16.msra.mxu0 0
      %288 = vmatprep.subr.bf16.mxu0 0
      %289 = vmatpush1.bf16.msra.mxu0 0
      %290 = vmatprep.subr.bf16.mxu0 0
      %291 = vmatpush1.bf16.msra.mxu0 0
      %292 = vmatprep.subr.bf16.mxu0 0
      %293 = vmatpush1.bf16.msra.mxu0 0
      %294 = vmatprep.mubr.bf16.mxu0 0
      %295 = vmatmul.mubr.bf16.gmra.mrb[0].mxu0 %v210
      %v296 = vpop.f32.mrb[0].mxu0
      %v297 = vadd.f32 %v200, %v296
      %v298 = vpop.f32.mrb[0].mxu0
      %v299 = vpop.f32.mrb[0].mxu0
      %v300 = vadd.f32 %v200, %v299
      %v301 = vpop.f32.mrb[0].mxu0
      %302 = vmatprep.mubr.bf16.mxu0 0
      %303 = vmatmul.mubr.bf16.gmra.mrb[0].mxu0 %v211
      %v304 = vpop.f32.mrb[0].mxu0
      %v305 = vadd.f32 %v200, %v304
      %v306 = vpop.f32.mrb[0].mxu0
      %v307 = vpop.f32.mrb[0].mxu0
      %v308 = vadd.f32 %v200, %v307
      %v309 = vpop.f32.mrb[0].mxu0
      %310 = vdwg.mxu0
      %v311 = vmax.f32 %v297, 0.0
      %v312 = vmax.f32 %v300, 0.0
      %v313 = vmax.f32 %v305, 0.0
      %v314 = vmax.f32 %v308, 0.0
      %vm315 = vcmask 130048
      %316 = vst.msk [vmem:[%s172] sm:$0xff] %vm315, %v311
      %317 = vst.msk [vmem:[%s172 + $0x8] sm:$0xff] %vm315, %v312
      %318 = vst.msk [vmem:[%s172 + $0x10] sm:$0xff] %vm315, %v313
      %319 = vst.msk [vmem:[%s172 + $0x18] sm:$0xff] %vm315, %v314
      %s320 = smul.u32 4, %s14
      %p321 = scmp.lt.s32.totalorder %s320, 7
      %s322 = scalar_select %p321, %s320, 7
      %s323 = smul.addr %s322, 8
      %s324 = scalar_lea.vmem %s3, %s323
      // Predicated region
      $region33: #{tpu_custom_call.1} parent=31 // pred_check
        %p325 = pneg %p100
      $region34: #{tpu_custom_call.1} parent=31 // pred_check_branch
        %327 = sbr.rel (%p325) target = $region36
      $region35: #{tpu_custom_call.1} parent=31 // pred_region
        %s328 = smul.u32 4, %s14
      $region36: #{tpu_custom_call.1} parent=31 // pred_fallthru
        _
    $region32: #{tpu_custom_call.1} parent=5 // pred_fallthru
      _
    %p329 = scmp.le.s32.totalorder 2, %s9
    // Predicated region
    $region37: #{tpu_custom_call.1} parent=5 // pred_check
      %p330 = pneg %p329
    $region38: #{tpu_custom_call.1} parent=5 // pred_check_branch
      %332 = sbr.rel (%p330) target = $region40
    $region39: #{tpu_custom_call.1} parent=5 // pred_region
      %s333 = ssub.s32 %s9, 2
      // Predicated region
      $region41: #{tpu_custom_call.1} parent=39 // pred_check
        %p334 = pneg %p106
      $region42: #{tpu_custom_call.1} parent=39 // pred_check_branch
        %336 = sbr.rel (%p334) target = $region44
      $region43: #{tpu_custom_call.1} parent=39 // pred_region
        %s337 = smul.u32 4, %s15
        %p338 = scmp.lt.s32.totalorder %s337, 7
        %s339 = scalar_select %p338, %s337, 7
        %s340 = smul.addr %s339, 8
        %s341 = scalar_lea.vmem %s3, %s340
      $region44: #{tpu_custom_call.1} parent=39 // pred_fallthru
        _
    $region40: #{tpu_custom_call.1} parent=5 // pred_fallthru
      _
  $region6: #{tpu_custom_call.1} parent=0 // loop_footer
    %s13 = sadd.s32 1, %s9
  $region7: #{tpu_custom_call.1} parent=0 // loop_footer_branch
    %8 = sbr.rel target = $region3
  $region8: #{tpu_custom_call.1} parent=0 // loop_exit
    _

// kernel: tpu_custom_call.1
$region0: #{tpu_custom_call.1}
  #allocation0 [shape = 'u32[]', space=smem, size = 0x4, offset = 0x4, fixed_abs, tag = 'smem constant byte address 0x4 - core index']
  #allocation1 [shape = 'u32[144,128]{1,0:T(1,128)}', space=vmem, size = 0x12000, scoped, tag = 'internal scratch']
  %s0 = inlined_call_operand.vmem [shape: bf16[64,128], index: 0, kind: input, shape index: {}]
  %s1 = inlined_call_operand.vmem [shape: bf16[128,16], index: 1, kind: input, shape index: {}]
  %s2 = inlined_call_operand.vmem [shape: f32[1,16], index: 2, kind: input, shape index: {}]
  %s3 = inlined_call_operand.vmem [shape: f32[64,16], index: 3, kind: output, shape index: {}]
  %s4 = sld [smem:[#allocation0]]
  $region45: #{tpu_custom_call.1} parent=0
    _
  %s6 = ssub.s32 1, %s4
  %s7 = scalar_select 0, %s6, %s4
  loop: start=0, step=1, limit=4
  $region2: #{tpu_custom_call.1} parent=0 // loop_pre_header
    _
  $region3: #{tpu_custom_call.1} parent=0 // loop_header
    %s9 = sphi 0, %s13
    %p10 = scmp.ge.s32.totalorder %s9, 4
    %s19 = sphi 0, %s21
    %s22 = sphi 0, %s19
    %s23 = sphi 0, %s22
    %s39 = sphi 0, %s23
    %s43 = sphi 0, %s43
    %s45 = sphi 0, %s43
    %s46 = sphi 0, %s45
    %s60 = sphi 0, %s46
    %s64 = sphi 0, %s64
    %s66 = sphi 0, %s64
    %s67 = sphi 0, %s66
    %s81 = sphi 0, %s67
    %s87 = sphi 0, %s89
    %s90 = sphi 0, %s87
    %s91 = sphi 0, %s90
    %s107 = sphi 0, %s91
  $region4: #{tpu_custom_call.1} parent=0 // loop_header_branch
    %12 = sbr.rel (%p10) target = $region8
  $region5: #{tpu_custom_call.1} parent=0 // loop_body
    %s14 = ssub.s32 %s9, 1
    %s15 = ssub.s32 %s9, 2
    %s16 = sadd.s32 %s9, 1
    %s17 = ssub.s32 %s9, %s16
    %p18 = scmp.eq.s32.totalorder %s17, 0
    %s20 = sadd.s32 %s19, 1
    %s21 = scalar_select %p18, %s19, %s20
    %p24 = pneg %p18
    %p25 = scmp.eq.s32.totalorder %s9, 1
    %p26 = por %p24, %p25
    %p27 = scmp.ne.s32.totalorder %s19, %s22
    %p28 = scmp.eq.s32.totalorder %s9, 0
    %p29 = por %p27, %p28
    %p30 = scmp.ne.s32.totalorder %s19, %s22
    %p31 = scmp.eq.s32.totalorder %s14, 1
    %p32 = por %p30, %p31
    %p33 = scmp.ne.s32.totalorder %s22, %s23
    %p34 = scmp.eq.s32.totalorder %s14, 0
    %p35 = por %p33, %p34
    %p36 = scmp.ne.s32.totalorder %s22, %s23
    %p37 = scmp.eq.s32.totalorder %s15, 1
    %p38 = por %p36, %p37
    %p40 = scmp.ne.s32.totalorder %s23, %s39
    %p41 = scmp.eq.s32.totalorder %s15, 0
    %p42 = por %p40, %p41
    %s44 = sadd.s32 %s43, 1
    %p47 = scmp.eq.s32.totalorder %s9, 1
    %p48 = scmp.ne.s32.totalorder %s43, %s45
    %p49 = scmp.eq.s32.totalorder %s9, 0
    %p50 = por %p48, %p49
    %p51 = scmp.ne.s32.totalorder %s43, %s45
    %p52 = scmp.eq.s32.totalorder %s14, 1
    %p53 = por %p51, %p52
    %p54 = scmp.ne.s32.totalorder %s45, %s46
    %p55 = scmp.eq.s32.totalorder %s14, 0
    %p56 = por %p54, %p55
    %p57 = scmp.ne.s32.totalorder %s45, %s46
    %p58 = scmp.eq.s32.totalorder %s15, 1
    %p59 = por %p57, %p58
    %p61 = scmp.ne.s32.totalorder %s46, %s60
    %p62 = scmp.eq.s32.totalorder %s15, 0
    %p63 = por %p61, %p62
    %s65 = sadd.s32 %s64, 1
    %p68 = scmp.eq.s32.totalorder %s9, 1
    %p69 = scmp.ne.s32.totalorder %s64, %s66
    %p70 = scmp.eq.s32.totalorder %s9, 0
    %p71 = por %p69, %p70
    %p72 = scmp.ne.s32.totalorder %s64, %s66
    %p73 = scmp.eq.s32.totalorder %s14, 1
    %p74 = por %p72, %p73
    %p75 = scmp.ne.s32.totalorder %s66, %s67
    %p76 = scmp.eq.s32.totalorder %s14, 0
    %p77 = por %p75, %p76
    %p78 = scmp.ne.s32.totalorder %s66, %s67
    %p79 = scmp.eq.s32.totalorder %s15, 1
    %p80 = por %p78, %p79
    %p82 = scmp.ne.s32.totalorder %s67, %s81
    %p83 = scmp.eq.s32.totalorder %s15, 0
    %p84 = por %p82, %p83
    %s85 = ssub.s32 %s9, %s16
    %p86 = scmp.eq.s32.totalorder %s85, 0
    %s88 = sadd.s32 %s87, 1
    %s89 = scalar_select %p86, %s87, %s88
    %p92 = pneg %p86
    %p93 = scmp.eq.s32.totalorder %s9, 1
    %p94 = por %p92, %p93
    %p95 = scmp.ne.s32.totalorder %s87, %s90
    %p96 = scmp.eq.s32.totalorder %s9, 0
    %p97 = por %p95, %p96
    %p98 = scmp.ne.s32.totalorder %s87, %s90
    %p99 = scmp.eq.s32.totalorder %s14, 1
    %p100 = por %p98, %p99
    %p101 = scmp.ne.s32.totalorder %s90, %s91
    %p102 = scmp.eq.s32.totalorder %s14, 0
    %p103 = por %p101, %p102
    %p104 = scmp.ne.s32.totalorder %s90, %s91
    %p105 = scmp.eq.s32.totalorder %s15, 1
    %p106 = por %p104, %p105
    %p108 = scmp.ne.s32.totalorder %s91, %s107
    %p109 = scmp.eq.s32.totalorder %s15, 0
    %p110 = por %p108, %p109
    %p111 = scmp.le.s32.totalorder 1, %s9
    %p112 = scmp.lt.s32.totalorder %s9, 3
    %p113 = pnand %p111, %p112
    %p114 = pneg %p113
    // Predicated region
    $region9: #{tpu_custom_call.1} parent=5 // pred_check
      _
    $region10: #{tpu_custom_call.1} parent=5 // pred_check_branch
      %116 = sbr.rel (%p113) target = $region12
    $region11: #{tpu_custom_call.1} parent=5 // pred_region
      %s117 = ssub.s32 %s9, 1
      // Predicated region
      $region13: #{tpu_custom_call.1} parent=11 // pred_check
        %p118 = pneg %p56
      $region14: #{tpu_custom_call.1} parent=11 // pred_check_branch
        %120 = sbr.rel (%p118) target = $region16
      $region15: #{tpu_custom_call.1} parent=11 // pred_region
        _
      $region16: #{tpu_custom_call.1} parent=11 // pred_fallthru
        _
      // Predicated region
      $region17: #{tpu_custom_call.1} parent=11 // pred_check
        %p121 = pneg %p77
      $region18: #{tpu_custom_call.1} parent=11 // pred_check_branch
        %123 = sbr.rel (%p121) target = $region20
      $region19: #{tpu_custom_call.1} parent=11 // pred_region
        _
      $region20: #{tpu_custom_call.1} parent=11 // pred_fallthru
        _
    $region12: #{tpu_custom_call.1} parent=5 // pred_fallthru
      _
    %p124 = scmp.lt.s32.totalorder %s9, 2
    // Predicated region
    $region21: #{tpu_custom_call.1} parent=5 // pred_check
      %p125 = pneg %p124
    $region22: #{tpu_custom_call.1} parent=5 // pred_check_branch
      %127 = sbr.rel (%p125) target = $region24
    $region23: #{tpu_custom_call.1} parent=5 // pred_region
      // Predicated region
      $region25: #{tpu_custom_call.1} parent=23 // pred_check
        %p128 = pneg %p29
      $region26: #{tpu_custom_call.1} parent=23 // pred_check_branch
        %130 = sbr.rel (%p128) target = $region28
      $region27: #{tpu_custom_call.1} parent=23 // pred_region
        %s131 = smul.u32 4, %s9
        %p132 = scmp.lt.s32.totalorder %s131, 7
        %s133 = scalar_select %p132, %s131, 7
        %s134 = smul.addr %s133, 4
        %s135 = scalar_lea.vmem %s0, %s134
        %s136 = smul.u32 4, %s9
      $region28: #{tpu_custom_call.1} parent=23 // pred_fallthru
        _
    $region24: #{tpu_custom_call.1} parent=5 // pred_fallthru
      _
    %p137 = scmp.le.s32.totalorder 1, %s9
    %p138 = scmp.lt.s32.totalorder %s9, 3
    %p139 = pnand %p137, %p138
    %p140 = pneg %p139
    // Predicated region
    $region29: #{tpu_custom_call.1} parent=5 // pred_check
      _
    $region30: #{tpu_custom_call.1} parent=5 // pred_check_branch
      %142 = sbr.rel (%p139) target = $region32
    $region31: #{tpu_custom_call.1} parent=5 // pred_region
      %s143 = ssub.s32 %s9, 1
      %s144 = smul.u32 4, %s14
      %p145 = scmp.lt.s32.totalorder %s144, 7
      %s146 = scalar_select %p145, %s144, 7
      %s147 = smul.addr %s146, 4
      %s148 = scalar_lea.vmem %s0, %s147
      %p149 = pneg %p35
      %p150 = pneg %p32
      %p151 = pneg %p56
      %p152 = pneg %p53
      %p153 = pneg %p77
      %p154 = pneg %p74
      %p155 = pneg %p103
      %p156 = pneg %p100
      %s157 = smul.u32 4, %s14
      %p158 = scmp.lt.s32.totalorder %s157, 7
      %s159 = scalar_select %p158, %s157, 7
      %s160 = smul.addr %s159, 8
      %s161 = scalar_lea.vmem %s3, %s160
      %s162 = smul.u32 4, %s14
      %p163 = scmp.lt.s32.totalorder %s162, 7
      %s164 = scalar_select %p163, %s162, 7
      %s165 = smul.addr %s164, 4
      %s166 = scalar_lea.vmem %s0, %s165
      %s167 = smul.u32 4, %s14
      %s168 = smul.u32 4, %s14
      %p169 = scmp.lt.s32.totalorder %s168, 7
      %s170 = scalar_select %p169, %s168, 7
      %s171 = smul.addr %s170, 8
      %s172 = scalar_lea.vmem %s3, %s171
      %s173 = smul.u32 4, %s14
      %v175 = vld [vmem:[%s166] sm:$0xf]
      %v176 = vld [vmem:[%s166 + $0x4] sm:$0xf]
      %v177 = vld [vmem:[%s166 + $0x8] sm:$0xf]
      %v178 = vld [vmem:[%s166 + $0xc] sm:$0xf]
      %v179 = vld [vmem:[%s1] sm:$0xf]
      %v180 = vld [vmem:[%s1 + $0x4] sm:$0xf]
      %v181 = vld [vmem:[%s1 + $0x8] sm:$0xf]
      %v182 = vld [vmem:[%s1 + $0xc] sm:$0xf]
      %v183 = vld [vmem:[%s1 + $0x10] sm:$0xf]
      %v184 = vld [vmem:[%s1 + $0x14] sm:$0xf]
      %v185 = vld [vmem:[%s1 + $0x18] sm:$0xf]
      %v186 = vld [vmem:[%s1 + $0x1c] sm:$0xf]
      %v187 = vld [vmem:[%s1 + $0x20] sm:$0xf]
      %v188 = vld [vmem:[%s1 + $0x24] sm:$0xf]
      %v189 = vld [vmem:[%s1 + $0x28] sm:$0xf]
      %v190 = vld [vmem:[%s1 + $0x2c] sm:$0xf]
      %v191 = vld [vmem:[%s1 + $0x30] sm:$0xf]
      %v192 = vld [vmem:[%s1 + $0x34] sm:$0xf]
      %v193 = vld [vmem:[%s1 + $0x38] sm:$0xf]
      %v194 = vld [vmem:[%s1 + $0x3c] sm:$0xf]
      %v195 = vld [vmem:[%s2] sm:$0x1]
      %v197 = vlaneseq
      %v198 = vshrl.u32 %v197, 7
      %v199 = vsub.s32 0, %v198
      %v200 = vrot.slane %v195, %v199
      %v206 = vunpack.c.l.b16 %v175
      %v207 = vunpack.c.l.b16 %v176
      %v208 = vunpack.c.l.b16 %v177
      %v209 = vunpack.c.l.b16 %v178
      %v210 = vpack.c.b16 %v207, %v206
      %v211 = vpack.c.b16 %v209, %v208
      %v230 = vunpack.c.l.b16 %v179
      %v231 = vunpack.c.l.b16 %v180
      %v232 = vunpack.c.l.b16 %v181
      %v233 = vunpack.c.l.b16 %v182
      %v234 = vunpack.c.l.b16 %v183
      %v235 = vunpack.c.l.b16 %v184
      %v236 = vunpack.c.l.b16 %v185
      %v237 = vunpack.c.l.b16 %v186
      %v238 = vunpack.c.l.b16 %v187
      %v239 = vunpack.c.l.b16 %v188
      %v240 = vunpack.c.l.b16 %v189
      %v241 = vunpack.c.l.b16 %v190
      %v242 = vunpack.c.l.b16 %v191
      %v243 = vunpack.c.l.b16 %v192
      %v244 = vunpack.c.l.b16 %v193
      %v245 = vunpack.c.l.b16 %v194
      %v246 = vpack.c.b16 %v231, %v230
      %v247 = vpack.c.b16 %v233, %v232
      %v248 = vpack.c.b16 %v235, %v234
      %v249 = vpack.c.b16 %v237, %v236
      %v250 = vpack.c.b16 %v239, %v238
      %v251 = vpack.c.b16 %v241, %v240
      %v252 = vpack.c.b16 %v243, %v242
      %v253 = vpack.c.b16 %v245, %v244
      %262 = vmatprep.subr.bf16.mxu0 0
      %263 = vmatpush1.bf16.msra.mxu0 %v246
      %264 = vmatprep.subr.bf16.mxu0 0
      %265 = vmatpush1.bf16.msra.mxu0 %v247
      %266 = vmatprep.subr.bf16.mxu0 0
      %267 = vmatpush1.bf16.msra.mxu0 %v248
      %268 = vmatprep.subr.bf16.mxu0 0
      %269 = vmatpush1.bf16.msra.mxu0 %v249
      %270 = vmatprep.subr.bf16.mxu0 0
      %271 = vmatpush1.bf16.msra.mxu0 %v250
      %272 = vmatprep.subr.bf16.mxu0 0
      %273 = vmatpush1.bf16.msra.mxu0 %v251
      %274 = vmatprep.subr.bf16.mxu0 0
      %275 = vmatpush1.bf16.msra.mxu0 %v252
      %276 = vmatprep.subr.bf16.mxu0 0
      %277 = vmatpush1.bf16.msra.mxu0 %v253
      %278 = vmatprep.subr.bf16.mxu0 0
      %279 = vmatpush1.bf16.msra.mxu0 0
      %280 = vmatprep.subr.bf16.mxu0 0
      %281 = vmatpush1.bf16.msra.mxu0 0
      %282 = vmatprep.subr.bf16.mxu0 0
      %283 = vmatpush1.bf16.msra.mxu0 0
      %284 = vmatprep.subr.bf16.mxu0 0
      %285 = vmatpush1.bf16.msra.mxu0 0
      %286 = vmatprep.subr.bf16.mxu0 0
      %287 = vmatpush1.bf16.msra.mxu0 0
      %288 = vmatprep.subr.bf16.mxu0 0
      %289 = vmatpush1.bf16.msra.mxu0 0
      %290 = vmatprep.subr.bf16.mxu0 0
      %291 = vmatpush1.bf16.msra.mxu0 0
      %292 = vmatprep.subr.bf16.mxu0 0
      %293 = vmatpush1.bf16.msra.mxu0 0
      %294 = vmatprep.mubr.bf16.mxu0 0
      %295 = vmatmul.mubr.bf16.gmra.mrb[0].mxu0 %v210
      %v296 = vpop.f32.mrb[0].mxu0
      %v297 = vadd.f32 %v200, %v296
      %v298 = vpop.f32.mrb[0].mxu0
      %v299 = vpop.f32.mrb[0].mxu0
      %v300 = vadd.f32 %v200, %v299
      %v301 = vpop.f32.mrb[0].mxu0
      %302 = vmatprep.mubr.bf16.mxu0 0
      %303 = vmatmul.mubr.bf16.gmra.mrb[0].mxu0 %v211
      %v304 = vpop.f32.mrb[0].mxu0
      %v305 = vadd.f32 %v200, %v304
      %v306 = vpop.f32.mrb[0].mxu0
      %v307 = vpop.f32.mrb[0].mxu0
      %v308 = vadd.f32 %v200, %v307
      %v309 = vpop.f32.mrb[0].mxu0
      %310 = vdwg.mxu0
      %v311 = vmax.f32 %v297, 0.0
      %v312 = vmax.f32 %v300, 0.0
      %v313 = vmax.f32 %v305, 0.0
      %v314 = vmax.f32 %v308, 0.0
      %vm315 = vcmask 130048
      %316 = vst.msk [vmem:[%s172] sm:$0xff] %vm315, %v311
      %317 = vst.msk [vmem:[%s172 + $0x8] sm:$0xff] %vm315, %v312
      %318 = vst.msk [vmem:[%s172 + $0x10] sm:$0xff] %vm315, %v313
      %319 = vst.msk [vmem:[%s172 + $0x18] sm:$0xff] %vm315, %v314
      %s320 = smul.u32 4, %s14
      %p321 = scmp.lt.s32.totalorder %s320, 7
      %s322 = scalar_select %p321, %s320, 7
      %s323 = smul.addr %s322, 8
      %s324 = scalar_lea.vmem %s3, %s323
      // Predicated region
      $region33: #{tpu_custom_call.1} parent=31 // pred_check
        %p325 = pneg %p100
      $region34: #{tpu_custom_call.1} parent=31 // pred_check_branch
        %327 = sbr.rel (%p325) target = $region36
      $region35: #{tpu_custom_call.1} parent=31 // pred_region
        %s328 = smul.u32 4, %s14
      $region36: #{tpu_custom_call.1} parent=31 // pred_fallthru
        _
    $region32: #{tpu_custom_call.1} parent=5 // pred_fallthru
      _
    %p329 = scmp.le.s32.totalorder 2, %s9
    // Predicated region
    $region37: #{tpu_custom_call.1} parent=5 // pred_check
      %p330 = pneg %p329
    $region38: #{tpu_custom_call.1} parent=5 // pred_check_branch
      %332 = sbr.rel (%p330) target = $region40
    $region39: #{tpu_custom_call.1} parent=5 // pred_region
      %s333 = ssub.s32 %s9, 2
      // Predicated region
      $region41: #{tpu_custom_call.1} parent=39 // pred_check
        %p334 = pneg %p106
      $region42: #{tpu_custom_call.1} parent=39 // pred_check_branch
        %336 = sbr.rel (%p334) target = $region44
      $region43: #{tpu_custom_call.1} parent=39 // pred_region
        %s337 = smul.u32 4, %s15
        %p338 = scmp.lt.s32.totalorder %s337, 7
        %s339 = scalar_select %p338, %s337, 7
        %s340 = smul.addr %s339, 8
        %s341 = scalar_lea.vmem %s3, %s340
      $region44: #{tpu_custom_call.1} parent=39 // pred_fallthru
        _
    $region40: #{tpu_custom_call.1} parent=5 // pred_fallthru
      _
  $region6: #{tpu_custom_call.1} parent=0 // loop_footer
    %s13 = sadd.s32 1, %s9
  $region7: #{tpu_custom_call.1} parent=0 // loop_footer_branch
    %8 = sbr.rel target = $region3
  $region8: #{tpu_custom_call.1} parent=0 // loop_exit
    _

</llo_original>
